<compile_context>
chip_gen: v7x
topology: tpu7x:2x2x1
jax: 0.10.0
libtpu: 0.0.40
codegen_flags: <defaults>
</compile_context>

<pallas_src>
import functools

import numpy as np
import jax
import jax.numpy as jnp
from jax.experimental import pallas as pl
from jax.experimental.pallas import tpu as pltpu

POOL = 4


@functools.lru_cache(maxsize=None)
def _build_constants(c, h, w):
    """Host-side constant matrices, built once per (c, h, w)."""
    hp, wp = h // POOL, w // POOL

    # W-pool matrix (w, wp): 1/4 on the 4 source rows feeding each pooled col.
    bmat = np.zeros((w, wp), np.float32)
    for j in range(wp):
        bmat[POOL * j:POOL * j + POOL, j] = 1.0 / POOL

    # H-pool matrix with the channel mean folded in: (hp, h), entries 1/(4*c).
    amat = np.zeros((hp, h), np.float32)
    for i in range(hp):
        amat[i, POOL * i:POOL * i + POOL] = 1.0 / (POOL * c)

    eye_w = np.eye(wp, dtype=np.float32)
    cl = eye_w - np.eye(wp, k=1, dtype=np.float32)    # (p@cl)[i,j] = p[i,j]-p[i,j-1]
    cr = eye_w - np.eye(wp, k=-1, dtype=np.float32)   # (p@cr)[i,j] = p[i,j]-p[i,j+1]

    eye_h = np.eye(hp, dtype=np.float32)
    cu = eye_h - np.eye(hp, k=-1, dtype=np.float32)   # (cu@p)[i,j] = p[i,j]-p[i-1,j]
    cd = eye_h - np.eye(hp, k=1, dtype=np.float32)    # (cd@p)[i,j] = p[i,j]-p[i+1,j]

    # Stage-1 fused matrix: columns = [W-pool*left | W-pool*right | W-pool].
    wf = np.concatenate([bmat @ cl, bmat @ cr, bmat], axis=1).astype(np.float32)  # (w, 3wp)
    a_lr = amat.astype(np.float32)                                                # (hp, h)
    a_ud = np.concatenate([cu @ amat, cd @ amat], axis=0).astype(np.float32)      # (2hp, h)
    fold = np.concatenate([np.eye(wp, dtype=np.float32),
                           np.eye(wp, dtype=np.float32)], axis=0)                 # (2wp, wp)
    return wf, a_lr, a_ud, fold


def _l_spa_kernel(org_ref, enh_ref, wf_ref, alr_ref, aud_ref, fold_ref,
                  out_ref, t_ref, *, loss_weight):
    bt, c, h, w = org_ref.shape
    _, hp, wp = out_ref.shape

    # Channel accumulation of the difference without materializing the full
    # (bt, c, h, w) temporary (linearity: everything downstream is linear).
    dsum = org_ref[:, 0, :, :] - enh_ref[:, 0, :, :]
    for ci in range(1, c):                                    # tiny static unroll
        dsum = dsum + (org_ref[:, ci, :, :] - enh_ref[:, ci, :, :])   # (bt, h, w)

    # Stage 1: one batch-merged matmul, M = bt*h, N = 3*wp.
    t = jnp.dot(dsum.reshape(bt * h, w), wf_ref[...],
                preferred_element_type=jnp.float32)           # (bt*h, 3wp)
    t_ref[...] = t.reshape(bt, h, 3 * wp)

    # Resident constants, loaded once (hoisted out of the per-sample loop).
    alr = alr_ref[...]       # (hp, h)
    aud = aud_ref[...]       # (2hp, h)
    fold = fold_ref[...]     # (2wp, wp)
    lw = jnp.float32(loss_weight)

    # Stage 2: per-sample H-pool (+ fused U/D diff) and square-accumulate.
    @pl.loop(0, bt)
    def _(ib):
        ti = t_ref[ib]                                        # (h, 3wp)
        lr = jnp.dot(alr, ti[:, : 2 * wp],
                     preferred_element_type=jnp.float32)      # (hp, 2wp) = [p@cl | p@cr]
        ud = jnp.dot(aud, ti[:, 2 * wp:],
                     preferred_element_type=jnp.float32)      # (2hp, wp) = [cu@p ; cd@p]
        e_lr = jnp.dot(lr * lr, fold,
                       preferred_element_type=jnp.float32)    # (hp, wp): fold halves w/o lane rotate
        e_ud = ud[:hp, :] ** 2 + ud[hp:, :] ** 2              # (hp, wp): sublane split
        out_ref[ib] = (lw * (e_lr + e_ud)).astype(out_ref.dtype)


def _vmem_info():
    """(vmem_capacity_bytes, multi_core_per_chip) — generation aware."""
    kind = ""
    try:
        kind = jax.devices()[0].device_kind.lower()
    except Exception:
        pass
    vmem_cap = None
    try:
        vmem_cap = int(pltpu.get_tpu_info().vmem_capacity_bytes)
    except Exception:
        vmem_cap = None
    looks_v7 = "7" in kind
    if vmem_cap is None:
        # Conservative for v7x-class (64 MiB/TC), full 128 MiB otherwise.
        vmem_cap = (64 << 20) if looks_v7 else (128 << 20)
    multi_core = looks_v7 or vmem_cap <= (64 << 20)
    return vmem_cap, multi_core


def _choose_bt(b, c, h, w, budget_bytes, multi_core):
    """Largest batch-block that (a) divides b, (b) fits explicit VMEM
    accounting, (c) on multi-TC parts keeps grid >= 4 (>= 2 steps per core)."""
    hp, wp = h // POOL, w // POOL
    per_bt = (2 * 2 * c * h * w * 4        # org + enh, double-buffered pipeline
              + h * w * 4                  # dsum temporary
              + h * 3 * wp * 4             # stage-1 scratch
              + 2 * hp * wp * 4)           # output block, double-buffered
    fixed = 2 * 4 * (w * 3 * wp + 3 * hp * h + 2 * wp * wp) + (1 << 20)
    max_bt = max(1, int((budget_bytes - fixed) // max(per_bt, 1)))
    min_grid = 4 if multi_core else 1
    best_ok, best_any = None, 1
    for cand in range(1, min(b, max_bt) + 1):
        if b % cand:
            continue
        best_any = cand
        if b // cand >= min_grid:
            best_ok = cand
    return best_ok if best_ok is not None else best_any


def l_spa(org, enhance, loss_weight=1.0):
    org = jnp.asarray(org, jnp.float32)
    enhance = jnp.asarray(enhance, jnp.float32)
    b, c, h, w = org.shape
    hp, wp = h // POOL, w // POOL

    vmem_cap, multi_core = _vmem_info()
    vmem_limit = int(vmem_cap * 3 // 4)
    bt = _choose_bt(b, c, h, w, (vmem_limit * 9) // 10, multi_core)
    grid = (b // bt,)

    wf_np, alr_np, aud_np, fold_np = _build_constants(c, h, w)
    wf = jnp.asarray(wf_np)
    a_lr = jnp.asarray(alr_np)
    a_ud = jnp.asarray(aud_np)
    fold = jnp.asarray(fold_np)

    kernel = functools.partial(_l_spa_kernel, loss_weight=float(loss_weight))

    flops = (2 * b * h * w * 3 * wp                      # stage-1 matmul
             + 2 * b * h * (hp * 2 * wp + 2 * hp * wp)   # stage-2 pooled matmuls
             + 2 * b * hp * 2 * wp * wp)                 # square-fold matmul
    bytes_accessed = (2 * b * c * h * w * 4 + b * hp * wp * 4
                      + 4 * (wf_np.size + alr_np.size + aud_np.size + fold_np.size))

    out = pl.pallas_call(
        kernel,
        out_shape=jax.ShapeDtypeStruct((b, hp, wp), jnp.float32),
        grid=grid,
        in_specs=[
            pl.BlockSpec((bt, c, h, w), lambda ib: (ib, 0, 0, 0)),
            pl.BlockSpec((bt, c, h, w), lambda ib: (ib, 0, 0, 0)),
            # Resident constants: same block index every step => DMA'd once.
            pl.BlockSpec((w, 3 * wp), lambda ib: (0, 0)),
            pl.BlockSpec((hp, h), lambda ib: (0, 0)),
            pl.BlockSpec((2 * hp, h), lambda ib: (0, 0)),
            pl.BlockSpec((2 * wp, wp), lambda ib: (0, 0)),
        ],
        out_specs=pl.BlockSpec((bt, hp, wp), lambda ib: (ib, 0, 0)),
        scratch_shapes=[pltpu.VMEM((bt, h, 3 * wp), jnp.float32)],
        compiler_params=pltpu.CompilerParams(
            dimension_semantics=("parallel",),
            vmem_limit_bytes=vmem_limit,
        ),
        cost_estimate=pl.CostEstimate(
            flops=int(flops), transcendentals=0, bytes_accessed=int(bytes_accessed)),
    )(org, enhance, wf, a_lr, a_ud, fold)

    return out.reshape(b, 1, hp, wp)


def l_spa_reference(org, enhance, loss_weight=1.0):
    """Plain-JAX reference mirroring the PyTorch forward (requires H%4==W%4==0)."""
    org = jnp.asarray(org, jnp.float32)
    enhance = jnp.asarray(enhance, jnp.float32)
    b, c, h, w = org.shape
    om = jnp.mean(org, axis=1, keepdims=True)
    em = jnp.mean(enhance, axis=1, keepdims=True)

    def pool(x):
        return x.reshape(b, 1, h // POOL, POOL, w // POOL, POOL).mean(axis=(3, 5))

    op, ep = pool(om), pool(em)

    def diffs(p):
        pad = jnp.pad(p, ((0, 0), (0, 0), (1, 1), (1, 1)))
        d_left = p - pad[:, :, 1:-1, :-2]
        d_right = p - pad[:, :, 1:-1, 2:]
        d_up = p - pad[:, :, :-2, 1:-1]
        d_down = p - pad[:, :, 2:, 1:-1]
        return d_left, d_right, d_up, d_down

    ol, orr, ou, od = diffs(op)
    el, er, eu, ed = diffs(ep)
    E = (ol - el) ** 2 + (orr - er) ** 2 + (ou - eu) ** 2 + (od - ed) ** 2
    return loss_weight * E


if __name__ == "__main__":
    key = jax.random.PRNGKey(0)
    k1, k2 = jax.random.split(key)
    b, c, h, w = 4, 3, 16, 16
    org = jax.random.uniform(k1, (b, c, h, w), dtype=jnp.float32)
    enhance = jax.random.uniform(k2, (b, c, h, w), dtype=jnp.float32)

    out = l_spa(org, enhance, loss_weight=1.0)
    out = jax.block_until_ready(out)

    ref = jax.block_until_ready(l_spa_reference(org, enhance, loss_weight=1.0))
    assert out.shape == (b, 1, h // POOL, w // POOL), out.shape
    np.testing.assert_allclose(np.asarray(out), np.asarray(ref), rtol=1e-4, atol=1e-5)

    print("KERNEL_OK")
</pallas_src>

<mosaic_0001>
module attributes {stable_mosaic.version = 11 : i64} {
  func.func @_l_spa_kernel(%arg0: i32, %arg1: memref<4x3x16x16xf32, #tpu.memory_space<vmem>>, %arg2: memref<4x3x16x16xf32, #tpu.memory_space<vmem>>, %arg3: memref<16x12xf32, #tpu.memory_space<vmem>>, %arg4: memref<4x16xf32, #tpu.memory_space<vmem>>, %arg5: memref<8x16xf32, #tpu.memory_space<vmem>>, %arg6: memref<8x4xf32, #tpu.memory_space<vmem>>, %arg7: memref<4x4x4xf32, #tpu.memory_space<vmem>>, %arg8: memref<4x16x12xf32, #tpu.memory_space<vmem>>) attributes {dimension_semantics = [#tpu.dimension_semantics<parallel>], iteration_bounds = array<i64: 1>, scalar_prefetch = 0 : i64, scratch_operands = 1 : i64, tpu.core_type = #tpu.core_type<tc>, window_params = [{transform_indices = @transform_0, window_bounds = array<i64: 4, 3, 16, 16>}, {transform_indices = @transform_1, window_bounds = array<i64: 4, 3, 16, 16>}, {pipeline_mode = #tpu.pipeline_mode<synchronous>, transform_indices = @transform_2, window_bounds = array<i64: 16, 12>}, {pipeline_mode = #tpu.pipeline_mode<synchronous>, transform_indices = @transform_3, window_bounds = array<i64: 4, 16>}, {pipeline_mode = #tpu.pipeline_mode<synchronous>, transform_indices = @transform_4, window_bounds = array<i64: 8, 16>}, {pipeline_mode = #tpu.pipeline_mode<synchronous>, transform_indices = @transform_5, window_bounds = array<i64: 8, 4>}, {transform_indices = @transform_6, window_bounds = array<i64: 4, 4, 4>}]} {
    %c0 = arith.constant 0 : index
    %c0_0 = arith.constant 0 : index
    %c0_1 = arith.constant 0 : index
    %c0_2 = arith.constant 0 : index
    %0 = vector.load %arg1[%c0, %c0_0, %c0_1, %c0_2] : memref<4x3x16x16xf32, #tpu.memory_space<vmem>>, vector<4x1x16x16xf32>
    %1 = vector.shape_cast %0 : vector<4x1x16x16xf32> to vector<4x16x16xf32>
    %c0_3 = arith.constant 0 : index
    %c0_4 = arith.constant 0 : index
    %c0_5 = arith.constant 0 : index
    %c0_6 = arith.constant 0 : index
    %2 = vector.load %arg2[%c0_3, %c0_4, %c0_5, %c0_6] : memref<4x3x16x16xf32, #tpu.memory_space<vmem>>, vector<4x1x16x16xf32>
    %3 = vector.shape_cast %2 : vector<4x1x16x16xf32> to vector<4x16x16xf32>
    %4 = arith.subf %1, %3 : vector<4x16x16xf32>
    %c0_7 = arith.constant 0 : index
    %c1 = arith.constant 1 : index
    %c0_8 = arith.constant 0 : index
    %c0_9 = arith.constant 0 : index
    %5 = vector.load %arg1[%c0_7, %c1, %c0_8, %c0_9] : memref<4x3x16x16xf32, #tpu.memory_space<vmem>>, vector<4x1x16x16xf32>
    %6 = vector.shape_cast %5 : vector<4x1x16x16xf32> to vector<4x16x16xf32>
    %c0_10 = arith.constant 0 : index
    %c1_11 = arith.constant 1 : index
    %c0_12 = arith.constant 0 : index
    %c0_13 = arith.constant 0 : index
    %7 = vector.load %arg2[%c0_10, %c1_11, %c0_12, %c0_13] : memref<4x3x16x16xf32, #tpu.memory_space<vmem>>, vector<4x1x16x16xf32>
    %8 = vector.shape_cast %7 : vector<4x1x16x16xf32> to vector<4x16x16xf32>
    %9 = arith.subf %6, %8 : vector<4x16x16xf32>
    %10 = arith.addf %4, %9 : vector<4x16x16xf32>
    %c0_14 = arith.constant 0 : index
    %c2 = arith.constant 2 : index
    %c0_15 = arith.constant 0 : index
    %c0_16 = arith.constant 0 : index
    %11 = vector.load %arg1[%c0_14, %c2, %c0_15, %c0_16] : memref<4x3x16x16xf32, #tpu.memory_space<vmem>>, vector<4x1x16x16xf32>
    %12 = vector.shape_cast %11 : vector<4x1x16x16xf32> to vector<4x16x16xf32>
    %c0_17 = arith.constant 0 : index
    %c2_18 = arith.constant 2 : index
    %c0_19 = arith.constant 0 : index
    %c0_20 = arith.constant 0 : index
    %13 = vector.load %arg2[%c0_17, %c2_18, %c0_19, %c0_20] : memref<4x3x16x16xf32, #tpu.memory_space<vmem>>, vector<4x1x16x16xf32>
    %14 = vector.shape_cast %13 : vector<4x1x16x16xf32> to vector<4x16x16xf32>
    %15 = arith.subf %12, %14 : vector<4x16x16xf32>
    %16 = arith.addf %10, %15 : vector<4x16x16xf32>
    %17 = vector.shape_cast %16 : vector<4x16x16xf32> to vector<64x16xf32>
    %c0_21 = arith.constant 0 : index
    %c0_22 = arith.constant 0 : index
    %18 = vector.load %arg3[%c0_21, %c0_22] : memref<16x12xf32, #tpu.memory_space<vmem>>, vector<16x12xf32>
    %cst = arith.constant dense<0.000000e+00> : vector<64x12xf32>
    %19 = tpu.matmul %17, %18, %cst {dimension_numbers = #tpu.dot_dimension_numbers<[1], [0], [0], [1], [0, 0, 1, 1], [], []>} : vector<64x16xf32>, vector<16x12xf32>, vector<64x12xf32> -> vector<64x12xf32>
    %20 = vector.shape_cast %19 : vector<64x12xf32> to vector<4x16x12xf32>
    %c0_23 = arith.constant 0 : index
    %c0_24 = arith.constant 0 : index
    %c0_25 = arith.constant 0 : index
    %21 = vector.load %arg8[%c0_23, %c0_24, %c0_25] : memref<4x16x12xf32, #tpu.memory_space<vmem>>, vector<4x16x12xf32>
    tpu.vector_store %arg8[%c0_23, %c0_24, %c0_25], %20 {strides = array<i32>} : memref<4x16x12xf32, #tpu.memory_space<vmem>>, vector<4x16x12xf32>,
    %c0_26 = arith.constant 0 : index
    %c0_27 = arith.constant 0 : index
    %22 = vector.load %arg4[%c0_26, %c0_27] : memref<4x16xf32, #tpu.memory_space<vmem>>, vector<4x16xf32>
    %c0_28 = arith.constant 0 : index
    %c0_29 = arith.constant 0 : index
    %23 = vector.load %arg5[%c0_28, %c0_29] : memref<8x16xf32, #tpu.memory_space<vmem>>, vector<8x16xf32>
    %c0_30 = arith.constant 0 : index
    %c0_31 = arith.constant 0 : index
    %24 = vector.load %arg6[%c0_30, %c0_31] : memref<8x4xf32, #tpu.memory_space<vmem>>, vector<8x4xf32>
    %cst_32 = arith.constant 1.000000e+00 : f32
    %c0_i32 = arith.constant 0 : i32
    %c4_i32 = arith.constant 4 : i32
    %25 = arith.addi %c0_i32, %c4_i32 : i32
    %c1_i32 = arith.constant 1 : i32
    scf.for %arg9 = %c0_i32 to %25 step %c1_i32  : i32 {
      %c1_i32_34 = arith.constant 1 : i32
      %26 = arith.muli %arg9, %c1_i32_34 : i32
      %c0_i32_35 = arith.constant 0 : i32
      %27 = arith.addi %c0_i32_35, %26 : i32
      %28 = arith.index_cast %27 : i32 to index
      %c0_36 = arith.constant 0 : index
      %c0_37 = arith.constant 0 : index
      %29 = vector.load %arg8[%28, %c0_36, %c0_37] : memref<4x16x12xf32, #tpu.memory_space<vmem>>, vector<1x16x12xf32>
      %30 = vector.shape_cast %29 : vector<1x16x12xf32> to vector<16x12xf32>
      %31 = vector.extract_strided_slice %30 {offsets = [0, 0], sizes = [16, 8], strides = [1, 1]} : vector<16x12xf32> to vector<16x8xf32>
      %cst_38 = arith.constant dense<0.000000e+00> : vector<4x8xf32>
      %32 = tpu.matmul %22, %31, %cst_38 {dimension_numbers = #tpu.dot_dimension_numbers<[1], [0], [0], [1], [0, 0, 1, 1], [], []>} : vector<4x16xf32>, vector<16x8xf32>, vector<4x8xf32> -> vector<4x8xf32>
      %33 = vector.extract_strided_slice %30 {offsets = [0, 8], sizes = [16, 4], strides = [1, 1]} : vector<16x12xf32> to vector<16x4xf32>
      %cst_39 = arith.constant dense<0.000000e+00> : vector<8x4xf32>
      %34 = tpu.matmul %23, %33, %cst_39 {dimension_numbers = #tpu.dot_dimension_numbers<[1], [0], [0], [1], [0, 0, 1, 1], [], []>} : vector<8x16xf32>, vector<16x4xf32>, vector<8x4xf32> -> vector<8x4xf32>
      %35 = arith.mulf %32, %32 : vector<4x8xf32>
      %cst_40 = arith.constant dense<0.000000e+00> : vector<4x4xf32>
      %36 = tpu.matmul %35, %24, %cst_40 {dimension_numbers = #tpu.dot_dimension_numbers<[1], [0], [0], [1], [0, 0, 1, 1], [], []>} : vector<4x8xf32>, vector<8x4xf32>, vector<4x4xf32> -> vector<4x4xf32>
      %37 = vector.extract_strided_slice %34 {offsets = [0, 0], sizes = [4, 4], strides = [1, 1]} : vector<8x4xf32> to vector<4x4xf32>
      %38 = arith.mulf %37, %37 : vector<4x4xf32>
      %39 = vector.extract_strided_slice %34 {offsets = [4, 0], sizes = [4, 4], strides = [1, 1]} : vector<8x4xf32> to vector<4x4xf32>
      %40 = arith.mulf %39, %39 : vector<4x4xf32>
      %41 = arith.addf %38, %40 : vector<4x4xf32>
      %42 = arith.addf %36, %41 : vector<4x4xf32>
      %43 = vector.broadcast %cst_32 : f32 to vector<4x4xf32>
      %44 = arith.mulf %43, %42 : vector<4x4xf32>
      %45 = arith.index_cast %27 : i32 to index
      %c0_41 = arith.constant 0 : index
      %c0_42 = arith.constant 0 : index
      %46 = vector.load %arg7[%45, %c0_41, %c0_42] : memref<4x4x4xf32, #tpu.memory_space<vmem>>, vector<1x4x4xf32>
      %47 = vector.shape_cast %46 : vector<1x4x4xf32> to vector<4x4xf32>
      %48 = vector.shape_cast %44 : vector<4x4xf32> to vector<1x4x4xf32>
      tpu.vector_store %arg7[%45, %c0_41, %c0_42], %48 {strides = array<i32>} : memref<4x4x4xf32, #tpu.memory_space<vmem>>, vector<1x4x4xf32>,
    }
    %c4_i32_33 = arith.constant 4 : i32
    return
  }
  func.func @transform_0(%arg0: i32) -> (i32, i32, i32, i32) {
    %c0_i32 = arith.constant 0 : i32
    %c0_i32_0 = arith.constant 0 : i32
    %c0_i32_1 = arith.constant 0 : i32
    %c0_i32_2 = arith.constant 0 : i32
    return %arg0, %c0_i32, %c0_i32_0, %c0_i32_1 : i32, i32, i32, i32
  }
  func.func @transform_1(%arg0: i32) -> (i32, i32, i32, i32) {
    %c0_i32 = arith.constant 0 : i32
    %c0_i32_0 = arith.constant 0 : i32
    %c0_i32_1 = arith.constant 0 : i32
    %c0_i32_2 = arith.constant 0 : i32
    return %arg0, %c0_i32, %c0_i32_0, %c0_i32_1 : i32, i32, i32, i32
  }
  func.func @transform_2(%arg0: i32) -> (i32, i32) {
    %c0_i32 = arith.constant 0 : i32
    %c0_i32_0 = arith.constant 0 : i32
    %c0_i32_1 = arith.constant 0 : i32
    return %c0_i32, %c0_i32_0 : i32, i32
  }
  func.func @transform_3(%arg0: i32) -> (i32, i32) {
    %c0_i32 = arith.constant 0 : i32
    %c0_i32_0 = arith.constant 0 : i32
    %c0_i32_1 = arith.constant 0 : i32
    return %c0_i32, %c0_i32_0 : i32, i32
  }
  func.func @transform_4(%arg0: i32) -> (i32, i32) {
    %c0_i32 = arith.constant 0 : i32
    %c0_i32_0 = arith.constant 0 : i32
    %c0_i32_1 = arith.constant 0 : i32
    return %c0_i32, %c0_i32_0 : i32, i32
  }
  func.func @transform_5(%arg0: i32) -> (i32, i32) {
    %c0_i32 = arith.constant 0 : i32
    %c0_i32_0 = arith.constant 0 : i32
    %c0_i32_1 = arith.constant 0 : i32
    return %c0_i32, %c0_i32_0 : i32, i32
  }
  func.func @transform_6(%arg0: i32) -> (i32, i32, i32) {
    %c0_i32 = arith.constant 0 : i32
    %c0_i32_0 = arith.constant 0 : i32
    %c0_i32_1 = arith.constant 0 : i32
    return %arg0, %c0_i32, %c0_i32_0 : i32, i32, i32
  }
}

</mosaic_0001>

<llo_original>
// kernel: tpu_custom_call.1
$region0: #{tpu_custom_call.1}
  #allocation0 [shape = 'u32[]', space=smem, size = 0x4, offset = 0x4, fixed_abs, tag = 'smem constant byte address 0x4 - core index']
  #allocation1 [shape = 'u32[144,128]{1,0:T(1,128)}', space=vmem, size = 0x12000, scoped, tag = 'internal scratch']
  #allocation2 [shape = 'f32[4,16,12]{2,1,0:T(8,128)}', space=vmem, size = 0x8000, scoped, tag = 'scratch operand']
  %s0 = inlined_call_operand.hbm [shape: f32[4,3,16,16], index: 0, kind: input, shape index: {}]
  %s1 = inlined_call_operand.hbm [shape: f32[4,3,16,16], index: 1, kind: input, shape index: {}]
  %s2 = inlined_call_operand.hbm [shape: f32[16,12], index: 2, kind: input, shape index: {}]
  %s3 = inlined_call_operand.hbm [shape: f32[4,16], index: 3, kind: input, shape index: {}]
  %s4 = inlined_call_operand.hbm [shape: f32[8,16], index: 4, kind: input, shape index: {}]
  %s5 = inlined_call_operand.hbm [shape: f32[8,4], index: 5, kind: input, shape index: {}]
  %s6 = inlined_call_operand.hbm [shape: f32[4,4,4], index: 6, kind: output, shape index: {}]
  %s7 = sld [smem:[#allocation0]]
  $region65: #{tpu_custom_call.1} parent=0
    _
  %s9 = ssub.s32 1, %s7
  %s10 = scalar_select 0, %s9, %s7
  $region1: #{tpu_custom_call.1} parent=0
    #allocation3 [shape = 'u8[98304]{0}', space=vmem, size = 0x18000, scoped, tag = 'input window, operand 0, single buffered']
    #allocation4 [shape = 's32[1]{0}', space=sflag, size = 0x4, scoped, tag = 'scoped memory for tpu_custom_call.1']
    #allocation5 [shape = 's32[1]{0}', space=sflag, size = 0x4, scoped, tag = 'scoped memory for tpu_custom_call.1']
    #allocation6 [shape = 'u8[98304]{0}', space=vmem, size = 0x18000, scoped, tag = 'input window, operand 1, single buffered']
    #allocation7 [shape = 's32[1]{0}', space=sflag, size = 0x4, scoped, tag = 'scoped memory for tpu_custom_call.1']
    #allocation8 [shape = 'u8[8192]{0}', space=vmem, size = 0x2000, scoped, tag = 'input window, operand 2, single buffered']
    #allocation9 [shape = 'u8[2048]{0}', space=vmem, size = 0x800, scoped, tag = 'input window, operand 3, single buffered']
    #allocation10 [shape = 's32[1]{0}', space=sflag, size = 0x4, scoped, tag = 'scoped memory for tpu_custom_call.1']
    #allocation11 [shape = 'u8[4096]{0}', space=vmem, size = 0x1000, scoped, tag = 'input window, operand 4, single buffered']
    #allocation12 [shape = 'u8[4096]{0}', space=vmem, size = 0x1000, scoped, tag = 'input window, operand 5, single buffered']
    #allocation13 [shape = 's32[1]{0}', space=sflag, size = 0x4, scoped, tag = 'scoped memory for tpu_custom_call.1']
    #allocation14 [shape = 'u8[8192]{0}', space=vmem, size = 0x2000, scoped, tag = 'output window, operand 0, single buffered']
    %11 = vsyncpa [#allocation4], 0
    %12 = vsyncpa [#allocation7], 0
    %13 = vsyncpa [#allocation10], 0
    %14 = vsyncpa [#allocation13], 0
    %15 = vsyncpa [#allocation5], 0
    // Predicated region
    $region2: #{tpu_custom_call.1} parent=1 // pred_check
      _
    $region3: #{tpu_custom_call.1} parent=1 // pred_check_branch
      %17 = sbr.rel (0) target = $region5
    $region4: #{tpu_custom_call.1} parent=1 // pred_region
      %s19 = ssub.s32 3072, 3072
      %20 = vsyncadd [#allocation4], %s19
      %s21 = sshll.u32 [#allocation3], 4
      %s22 = int_to_ptr.vmem [resolvable:$true] %s21
      %27 = dma.hbm_to_vmem [thread:$0]  %s0, 3072, %s22, [#allocation4], 128, 128, 8
    $region5: #{tpu_custom_call.1} parent=1 // pred_fallthru
      _
    // Predicated region
    $region6: #{tpu_custom_call.1} parent=1 // pred_check
      _
    $region7: #{tpu_custom_call.1} parent=1 // pred_check_branch
      %29 = sbr.rel (0) target = $region9
    $region8: #{tpu_custom_call.1} parent=1 // pred_region
      %s31 = ssub.s32 3072, 3072
      %32 = vsyncadd [#allocation7], %s31
      %s33 = sshll.u32 [#allocation6], 4
      %s34 = int_to_ptr.vmem [resolvable:$true] %s33
      %39 = dma.hbm_to_vmem [thread:$0]  %s1, 3072, %s34, [#allocation7], 128, 128, 8
    $region9: #{tpu_custom_call.1} parent=1 // pred_fallthru
      _
    // Predicated region
    $region10: #{tpu_custom_call.1} parent=1 // pred_check
      _
    $region11: #{tpu_custom_call.1} parent=1 // pred_check_branch
      %41 = sbr.rel (0) target = $region13
    $region12: #{tpu_custom_call.1} parent=1 // pred_region
      %s43 = ssub.s32 256, 256
      %44 = vsyncadd [#allocation7], %s43
      %s45 = sshll.u32 [#allocation8], 4
      %s46 = int_to_ptr.vmem [resolvable:$true] %s45
      %51 = dma.hbm_to_vmem [thread:$0]  %s2, 256, %s46, [#allocation7], 128, 128, 8
    $region13: #{tpu_custom_call.1} parent=1 // pred_fallthru
      _
    // Predicated region
    $region14: #{tpu_custom_call.1} parent=1 // pred_check
      _
    $region15: #{tpu_custom_call.1} parent=1 // pred_check_branch
      %53 = sbr.rel (0) target = $region17
    $region16: #{tpu_custom_call.1} parent=1 // pred_region
      %s55 = ssub.s32 64, 64
      %56 = vsyncadd [#allocation10], %s55
      %s58 = sshll.u32 [#allocation9], 4
      %s59 = int_to_ptr.vmem [resolvable:$true] %s58
      %61 = dma.hbm_to_vmem [thread:$0]  %s3, 64, %s59, [#allocation10]
    $region17: #{tpu_custom_call.1} parent=1 // pred_fallthru
      _
    // Predicated region
    $region18: #{tpu_custom_call.1} parent=1 // pred_check
      _
    $region19: #{tpu_custom_call.1} parent=1 // pred_check_branch
      %63 = sbr.rel (0) target = $region21
    $region20: #{tpu_custom_call.1} parent=1 // pred_region
      %s65 = ssub.s32 128, 128
      %66 = vsyncadd [#allocation10], %s65
      %s68 = sshll.u32 [#allocation11], 4
      %s69 = int_to_ptr.vmem [resolvable:$true] %s68
      %71 = dma.hbm_to_vmem [thread:$0]  %s4, 128, %s69, [#allocation10]
    $region21: #{tpu_custom_call.1} parent=1 // pred_fallthru
      _
    // Predicated region
    $region22: #{tpu_custom_call.1} parent=1 // pred_check
      _
    $region23: #{tpu_custom_call.1} parent=1 // pred_check_branch
      %73 = sbr.rel (0) target = $region25
    $region24: #{tpu_custom_call.1} parent=1 // pred_region
      %s75 = ssub.s32 128, 128
      %76 = vsyncadd [#allocation13], %s75
      %s78 = sshll.u32 [#allocation12], 4
      %s79 = int_to_ptr.vmem [resolvable:$true] %s78
      %81 = dma.hbm_to_vmem [thread:$0]  %s5, 128, %s79, [#allocation13]
    $region25: #{tpu_custom_call.1} parent=1 // pred_fallthru
      _
    // Predicated region
    $region26: #{tpu_custom_call.1} parent=1 // pred_check
      _
    $region27: #{tpu_custom_call.1} parent=1 // pred_check_branch
      %83 = sbr.rel (0) target = $region29
    $region28: #{tpu_custom_call.1} parent=1 // pred_region
      %84 = dma.done [#allocation4], 3072
    $region29: #{tpu_custom_call.1} parent=1 // pred_fallthru
      _
    // Predicated region
    $region30: #{tpu_custom_call.1} parent=1 // pred_check
      _
    $region31: #{tpu_custom_call.1} parent=1 // pred_check_branch
      %86 = sbr.rel (0) target = $region33
    $region32: #{tpu_custom_call.1} parent=1 // pred_region
      %87 = dma.done [#allocation7], 3072
    $region33: #{tpu_custom_call.1} parent=1 // pred_fallthru
      _
    // Predicated region
    $region34: #{tpu_custom_call.1} parent=1 // pred_check
      _
    $region35: #{tpu_custom_call.1} parent=1 // pred_check_branch
      %89 = sbr.rel (0) target = $region37
    $region36: #{tpu_custom_call.1} parent=1 // pred_region
      %90 = dma.done [#allocation7], 256
    $region37: #{tpu_custom_call.1} parent=1 // pred_fallthru
      _
    // Predicated region
    $region38: #{tpu_custom_call.1} parent=1 // pred_check
      _
    $region39: #{tpu_custom_call.1} parent=1 // pred_check_branch
      %92 = sbr.rel (0) target = $region41
    $region40: #{tpu_custom_call.1} parent=1 // pred_region
      %93 = dma.done [#allocation10], 64
    $region41: #{tpu_custom_call.1} parent=1 // pred_fallthru
      _
    // Predicated region
    $region42: #{tpu_custom_call.1} parent=1 // pred_check
      _
    $region43: #{tpu_custom_call.1} parent=1 // pred_check_branch
      %95 = sbr.rel (0) target = $region45
    $region44: #{tpu_custom_call.1} parent=1 // pred_region
      %96 = dma.done [#allocation10], 128
    $region45: #{tpu_custom_call.1} parent=1 // pred_fallthru
      _
    // Predicated region
    $region46: #{tpu_custom_call.1} parent=1 // pred_check
      _
    $region47: #{tpu_custom_call.1} parent=1 // pred_check_branch
      %98 = sbr.rel (0) target = $region49
    $region48: #{tpu_custom_call.1} parent=1 // pred_region
      %99 = dma.done [#allocation13], 128
    $region49: #{tpu_custom_call.1} parent=1 // pred_fallthru
      _
    %v100 = vld [vmem:[#allocation3] sm:$0xff]
    %v101 = vld [vmem:[#allocation3 + $0x8] sm:$0xff]
    %v102 = vld [vmem:[#allocation3 + $0x30] sm:$0xff]
    %v103 = vld [vmem:[#allocation3 + $0x38] sm:$0xff]
    %v104 = vld [vmem:[#allocation3 + $0x60] sm:$0xff]
    %v105 = vld [vmem:[#allocation3 + $0x68] sm:$0xff]
    %v106 = vld [vmem:[#allocation3 + $0x90] sm:$0xff]
    %v107 = vld [vmem:[#allocation3 + $0x98] sm:$0xff]
    %v108 = vld [vmem:[#allocation6] sm:$0xff]
    %v109 = vld [vmem:[#allocation6 + $0x8] sm:$0xff]
    %v110 = vld [vmem:[#allocation6 + $0x30] sm:$0xff]
    %v111 = vld [vmem:[#allocation6 + $0x38] sm:$0xff]
    %v112 = vld [vmem:[#allocation6 + $0x60] sm:$0xff]
    %v113 = vld [vmem:[#allocation6 + $0x68] sm:$0xff]
    %v114 = vld [vmem:[#allocation6 + $0x90] sm:$0xff]
    %v115 = vld [vmem:[#allocation6 + $0x98] sm:$0xff]
    %v116 = vsub.f32 %v100, %v108
    %v117 = vsub.f32 %v101, %v109
    %v118 = vsub.f32 %v102, %v110
    %v119 = vsub.f32 %v103, %v111
    %v120 = vsub.f32 %v104, %v112
    %v121 = vsub.f32 %v105, %v113
    %v122 = vsub.f32 %v106, %v114
    %v123 = vsub.f32 %v107, %v115
    %s124 = scalar_lea.vmem [#allocation3], 16
    %v125 = vld [vmem:[%s124] sm:$0xff]
    %v126 = vld [vmem:[%s124 + $0x8] sm:$0xff]
    %v127 = vld [vmem:[%s124 + $0x30] sm:$0xff]
    %v128 = vld [vmem:[%s124 + $0x38] sm:$0xff]
    %v129 = vld [vmem:[%s124 + $0x60] sm:$0xff]
    %v130 = vld [vmem:[%s124 + $0x68] sm:$0xff]
    %v131 = vld [vmem:[%s124 + $0x90] sm:$0xff]
    %v132 = vld [vmem:[%s124 + $0x98] sm:$0xff]
    %s133 = scalar_lea.vmem [#allocation6], 16
    %v134 = vld [vmem:[%s133] sm:$0xff]
    %v135 = vld [vmem:[%s133 + $0x8] sm:$0xff]
    %v136 = vld [vmem:[%s133 + $0x30] sm:$0xff]
    %v137 = vld [vmem:[%s133 + $0x38] sm:$0xff]
    %v138 = vld [vmem:[%s133 + $0x60] sm:$0xff]
    %v139 = vld [vmem:[%s133 + $0x68] sm:$0xff]
    %v140 = vld [vmem:[%s133 + $0x90] sm:$0xff]
    %v141 = vld [vmem:[%s133 + $0x98] sm:$0xff]
    %v142 = vsub.f32 %v125, %v134
    %v143 = vsub.f32 %v126, %v135
    %v144 = vsub.f32 %v127, %v136
    %v145 = vsub.f32 %v128, %v137
    %v146 = vsub.f32 %v129, %v138
    %v147 = vsub.f32 %v130, %v139
    %v148 = vsub.f32 %v131, %v140
    %v149 = vsub.f32 %v132, %v141
    %v150 = vadd.f32 %v116, %v142
    %v151 = vadd.f32 %v117, %v143
    %v152 = vadd.f32 %v118, %v144
    %v153 = vadd.f32 %v119, %v145
    %v154 = vadd.f32 %v120, %v146
    %v155 = vadd.f32 %v121, %v147
    %v156 = vadd.f32 %v122, %v148
    %v157 = vadd.f32 %v123, %v149
    %s158 = scalar_lea.vmem [#allocation3], 32
    %v159 = vld [vmem:[%s158] sm:$0xff]
    %v160 = vld [vmem:[%s158 + $0x8] sm:$0xff]
    %v161 = vld [vmem:[%s158 + $0x30] sm:$0xff]
    %v162 = vld [vmem:[%s158 + $0x38] sm:$0xff]
    %v163 = vld [vmem:[%s158 + $0x60] sm:$0xff]
    %v164 = vld [vmem:[%s158 + $0x68] sm:$0xff]
    %v165 = vld [vmem:[%s158 + $0x90] sm:$0xff]
    %v166 = vld [vmem:[%s158 + $0x98] sm:$0xff]
    %s167 = scalar_lea.vmem [#allocation6], 32
    %v168 = vld [vmem:[%s167] sm:$0xff]
    %v169 = vld [vmem:[%s167 + $0x8] sm:$0xff]
    %v170 = vld [vmem:[%s167 + $0x30] sm:$0xff]
    %v171 = vld [vmem:[%s167 + $0x38] sm:$0xff]
    %v172 = vld [vmem:[%s167 + $0x60] sm:$0xff]
    %v173 = vld [vmem:[%s167 + $0x68] sm:$0xff]
    %v174 = vld [vmem:[%s167 + $0x90] sm:$0xff]
    %v175 = vld [vmem:[%s167 + $0x98] sm:$0xff]
    %v176 = vsub.f32 %v159, %v168
    %v177 = vsub.f32 %v160, %v169
    %v178 = vsub.f32 %v161, %v170
    %v179 = vsub.f32 %v162, %v171
    %v180 = vsub.f32 %v163, %v172
    %v181 = vsub.f32 %v164, %v173
    %v182 = vsub.f32 %v165, %v174
    %v183 = vsub.f32 %v166, %v175
    %v184 = vadd.f32 %v150, %v176
    %v185 = vadd.f32 %v151, %v177
    %v186 = vadd.f32 %v152, %v178
    %v187 = vadd.f32 %v153, %v179
    %v188 = vadd.f32 %v154, %v180
    %v189 = vadd.f32 %v155, %v181
    %v190 = vadd.f32 %v156, %v182
    %v191 = vadd.f32 %v157, %v183
    %v192 = vld [vmem:[#allocation8] sm:$0xff]
    %v193 = vld [vmem:[#allocation8 + $0x8] sm:$0xff]
    %vm194 = vcmask 130048
    %v196 = vsel %vm194, %v184, 0
    %v199 = vsel %vm194, %v185, 0
    %v202 = vsel %vm194, %v186, 0
    %v205 = vsel %vm194, %v187, 0
    %v208 = vsel %vm194, %v188, 0
    %v211 = vsel %vm194, %v189, 0
    %v214 = vsel %vm194, %v190, 0
    %v217 = vsel %vm194, %v191, 0
    %219 = vmatprep.subr.mxu0 0.0
    %220 = vmatpush1.msra.mxu0 %v192
    %221 = vmatprep.subr.mxu0 0.0
    %222 = vmatpush1.msra.mxu0 %v193
    %223 = vmatprep.subr.mxu0 0.0
    %224 = vmatpush1.msra.mxu0 0.0
    %225 = vmatprep.subr.mxu0 0.0
    %226 = vmatpush1.msra.mxu0 0.0
    %227 = vmatprep.subr.mxu0 0.0
    %228 = vmatpush1.msra.mxu0 0.0
    %229 = vmatprep.subr.mxu0 0.0
    %230 = vmatpush1.msra.mxu0 0.0
    %231 = vmatprep.subr.mxu0 0.0
    %232 = vmatpush1.msra.mxu0 0.0
    %233 = vmatprep.subr.mxu0 0.0
    %234 = vmatpush1.msra.mxu0 0.0
    %235 = vmatprep.subr.mxu0 0.0
    %236 = vmatpush1.msra.mxu0 0.0
    %237 = vmatprep.subr.mxu0 0.0
    %238 = vmatpush1.msra.mxu0 0.0
    %239 = vmatprep.subr.mxu0 0.0
    %240 = vmatpush1.msra.mxu0 0.0
    %241 = vmatprep.subr.mxu0 0.0
    %242 = vmatpush1.msra.mxu0 0.0
    %243 = vmatprep.subr.mxu0 0.0
    %244 = vmatpush1.msra.mxu0 0.0
    %245 = vmatprep.subr.mxu0 0.0
    %246 = vmatpush1.msra.mxu0 0.0
    %247 = vmatprep.subr.mxu0 0.0
    %248 = vmatpush1.msra.mxu0 0.0
    %249 = vmatprep.subr.mxu0 0.0
    %250 = vmatpush1.msra.mxu0 0.0
    %251 = vmatprep.subr.mxu0 0.0
    %252 = vmatpush1.msra.mxu0 0.0
    %253 = vmatprep.subr.mxu0 0.0
    %254 = vmatpush1.msra.mxu0 0.0
    %255 = vmatprep.subr.mxu0 0.0
    %256 = vmatpush1.msra.mxu0 0.0
    %257 = vmatprep.subr.mxu0 0.0
    %258 = vmatpush1.msra.mxu0 0.0
    %259 = vmatprep.subr.mxu0 0.0
    %260 = vmatpush1.msra.mxu0 0.0
    %261 = vmatprep.subr.mxu0 0.0
    %262 = vmatpush1.msra.mxu0 0.0
    %263 = vmatprep.subr.mxu0 0.0
    %264 = vmatpush1.msra.mxu0 0.0
    %265 = vmatprep.subr.mxu0 0.0
    %266 = vmatpush1.msra.mxu0 0.0
    %267 = vmatprep.subr.mxu0 0.0
    %268 = vmatpush1.msra.mxu0 0.0
    %269 = vmatprep.subr.mxu0 0.0
    %270 = vmatpush1.msra.mxu0 0.0
    %271 = vmatprep.subr.mxu0 0.0
    %272 = vmatpush1.msra.mxu0 0.0
    %273 = vmatprep.subr.mxu0 0.0
    %274 = vmatpush1.msra.mxu0 0.0
    %275 = vmatprep.subr.mxu0 0.0
    %276 = vmatpush1.msra.mxu0 0.0
    %277 = vmatprep.subr.mxu0 0.0
    %278 = vmatpush1.msra.mxu0 0.0
    %279 = vmatprep.subr.mxu0 0.0
    %280 = vmatpush1.msra.mxu0 0.0
    %281 = vmatprep.subr.mxu0 0.0
    %282 = vmatpush1.msra.mxu0 0.0
    %283 = vmatprep.mubr.f32.mxu0 0.0
    %284 = vmatmul.mubr.f32.gmra.mrb[0].mxu0 %v196
    %v285 = vpop.f32.mrb[0].mxu0
    %v286 = vadd.f32 0.0, %v285
    %v287 = vpop.f32.mrb[0].mxu0
    %288 = vmatprep.mubr.f32.mxu0 0.0
    %289 = vmatmul.mubr.f32.gmra.mrb[0].mxu0 %v199
    %v290 = vpop.f32.mrb[0].mxu0
    %v291 = vadd.f32 0.0, %v290
    %v292 = vpop.f32.mrb[0].mxu0
    %293 = vmatprep.mubr.f32.mxu0 0.0
    %294 = vmatmul.mubr.f32.gmra.mrb[0].mxu0 %v202
    %v295 = vpop.f32.mrb[0].mxu0
    %v296 = vadd.f32 0.0, %v295
    %v297 = vpop.f32.mrb[0].mxu0
    %298 = vmatprep.mubr.f32.mxu0 0.0
    %299 = vmatmul.mubr.f32.gmra.mrb[0].mxu0 %v205
    %v300 = vpop.f32.mrb[0].mxu0
    %v301 = vadd.f32 0.0, %v300
    %v302 = vpop.f32.mrb[0].mxu0
    %303 = vmatprep.mubr.f32.mxu0 0.0
    %304 = vmatmul.mubr.f32.gmra.mrb[0].mxu0 %v208
    %v305 = vpop.f32.mrb[0].mxu0
    %v306 = vadd.f32 0.0, %v305
    %v307 = vpop.f32.mrb[0].mxu0
    %308 = vmatprep.mubr.f32.mxu0 0.0
    %309 = vmatmul.mubr.f32.gmra.mrb[0].mxu0 %v211
    %v310 = vpop.f32.mrb[0].mxu0
    %v311 = vadd.f32 0.0, %v310
    %v312 = vpop.f32.mrb[0].mxu0
    %313 = vmatprep.mubr.f32.mxu0 0.0
    %314 = vmatmul.mubr.f32.gmra.mrb[0].mxu0 %v214
    %v315 = vpop.f32.mrb[0].mxu0
    %v316 = vadd.f32 0.0, %v315
    %v317 = vpop.f32.mrb[0].mxu0
    %318 = vmatprep.mubr.f32.mxu0 0.0
    %319 = vmatmul.mubr.f32.gmra.mrb[0].mxu0 %v217
    %v320 = vpop.f32.mrb[0].mxu0
    %v321 = vadd.f32 0.0, %v320
    %v322 = vpop.f32.mrb[0].mxu0
    %323 = vdwg.mxu0
    %vm324 = vcmask 97280
    %325 = vst.msk [vmem:[#allocation2] sm:$0xff] %vm324, %v286
    %326 = vst.msk [vmem:[#allocation2 + $0x8] sm:$0xff] %vm324, %v291
    %327 = vst.msk [vmem:[#allocation2 + $0x10] sm:$0xff] %vm324, %v296
    %328 = vst.msk [vmem:[#allocation2 + $0x18] sm:$0xff] %vm324, %v301
    %329 = vst.msk [vmem:[#allocation2 + $0x20] sm:$0xff] %vm324, %v306
    %330 = vst.msk [vmem:[#allocation2 + $0x28] sm:$0xff] %vm324, %v311
    %331 = vst.msk [vmem:[#allocation2 + $0x30] sm:$0xff] %vm324, %v316
    %332 = vst.msk [vmem:[#allocation2 + $0x38] sm:$0xff] %vm324, %v321
    %v333 = vld [vmem:[#allocation9] sm:$0xf]
    %v334 = vld [vmem:[#allocation11] sm:$0xff]
    %v335 = vld [vmem:[#allocation12] sm:$0xff]
    loop: start=0, step=1, limit=4
    $region50: #{tpu_custom_call.1} parent=1 // loop_pre_header
      _
    $region51: #{tpu_custom_call.1} parent=1 // loop_header
      %s337 = sphi 0, %s341
      %p338 = scmp.ge.s32.totalorder %s337, 4
    $region52: #{tpu_custom_call.1} parent=1 // loop_header_branch
      %340 = sbr.rel (%p338) target = $region56
    $region53: #{tpu_custom_call.1} parent=1 // loop_body
      %s342 = smul.u32 %s337, 16
      %s343 = scalar_lea.vmem [#allocation2], %s342
      %v344 = vld [vmem:[%s343] sm:$0xff]
      %v345 = vld [vmem:[%s343 + $0x8] sm:$0xff]
      %v347 = vsel %vm194, %v333, 0
      %349 = vmatprep.subr.mxu0 0.0
      %350 = vmatpush1.msra.mxu0 %v344
      %351 = vmatprep.subr.mxu0 0.0
      %352 = vmatpush1.msra.mxu0 %v345
      %353 = vmatprep.subr.mxu0 0.0
      %354 = vmatpush1.msra.mxu0 0.0
      %355 = vmatprep.subr.mxu0 0.0
      %356 = vmatpush1.msra.mxu0 0.0
      %357 = vmatprep.subr.mxu0 0.0
      %358 = vmatpush1.msra.mxu0 0.0
      %359 = vmatprep.subr.mxu0 0.0
      %360 = vmatpush1.msra.mxu0 0.0
      %361 = vmatprep.subr.mxu0 0.0
      %362 = vmatpush1.msra.mxu0 0.0
      %363 = vmatprep.subr.mxu0 0.0
      %364 = vmatpush1.msra.mxu0 0.0
      %365 = vmatprep.subr.mxu0 0.0
      %366 = vmatpush1.msra.mxu0 0.0
      %367 = vmatprep.subr.mxu0 0.0
      %368 = vmatpush1.msra.mxu0 0.0
      %369 = vmatprep.subr.mxu0 0.0
      %370 = vmatpush1.msra.mxu0 0.0
      %371 = vmatprep.subr.mxu0 0.0
      %372 = vmatpush1.msra.mxu0 0.0
      %373 = vmatprep.subr.mxu0 0.0
      %374 = vmatpush1.msra.mxu0 0.0
      %375 = vmatprep.subr.mxu0 0.0
      %376 = vmatpush1.msra.mxu0 0.0
      %377 = vmatprep.subr.mxu0 0.0
      %378 = vmatpush1.msra.mxu0 0.0
      %379 = vmatprep.subr.mxu0 0.0
      %380 = vmatpush1.msra.mxu0 0.0
      %381 = vmatprep.subr.mxu0 0.0
      %382 = vmatpush1.msra.mxu0 0.0
      %383 = vmatprep.subr.mxu0 0.0
      %384 = vmatpush1.msra.mxu0 0.0
      %385 = vmatprep.subr.mxu0 0.0
      %386 = vmatpush1.msra.mxu0 0.0
      %387 = vmatprep.subr.mxu0 0.0
      %388 = vmatpush1.msra.mxu0 0.0
      %389 = vmatprep.subr.mxu0 0.0
      %390 = vmatpush1.msra.mxu0 0.0
      %391 = vmatprep.subr.mxu0 0.0
      %392 = vmatpush1.msra.mxu0 0.0
      %393 = vmatprep.subr.mxu0 0.0
      %394 = vmatpush1.msra.mxu0 0.0
      %395 = vmatprep.subr.mxu0 0.0
      %396 = vmatpush1.msra.mxu0 0.0
      %397 = vmatprep.subr.mxu0 0.0
      %398 = vmatpush1.msra.mxu0 0.0
      %399 = vmatprep.subr.mxu0 0.0
      %400 = vmatpush1.msra.mxu0 0.0
      %401 = vmatprep.subr.mxu0 0.0
      %402 = vmatpush1.msra.mxu0 0.0
      %403 = vmatprep.subr.mxu0 0.0
      %404 = vmatpush1.msra.mxu0 0.0
      %405 = vmatprep.subr.mxu0 0.0
      %406 = vmatpush1.msra.mxu0 0.0
      %407 = vmatprep.subr.mxu0 0.0
      %408 = vmatpush1.msra.mxu0 0.0
      %409 = vmatprep.subr.mxu0 0.0
      %410 = vmatpush1.msra.mxu0 0.0
      %411 = vmatprep.subr.mxu0 0.0
      %412 = vmatpush1.msra.mxu0 0.0
      %413 = vmatprep.mubr.f32.mxu0 0.0
      %414 = vmatmul.mubr.f32.gmra.mrb[0].mxu0 %v347
      %v415 = vpop.f32.mrb[0].mxu0
      %v416 = vadd.f32 0.0, %v415
      %v417 = vpop.f32.mrb[0].mxu0
      %418 = vdwg.mxu0
      %421 = vrot.lane.b32.xlu0 %v344, 120
      %v422 = vpop.permute.xlu0 %421
      %423 = vrot.lane.b32.xlu0 %v345, 120
      %v424 = vpop.permute.xlu0 %423
      %v428 = vsel %vm194, %v334, 0
      %430 = vmatprep.subr.mxu0 0.0
      %431 = vmatpush1.msra.mxu0 %v422
      %432 = vmatprep.subr.mxu0 0.0
      %433 = vmatpush1.msra.mxu0 %v424
      %434 = vmatprep.subr.mxu0 0.0
      %435 = vmatpush1.msra.mxu0 0.0
      %436 = vmatprep.subr.mxu0 0.0
      %437 = vmatpush1.msra.mxu0 0.0
      %438 = vmatprep.subr.mxu0 0.0
      %439 = vmatpush1.msra.mxu0 0.0
      %440 = vmatprep.subr.mxu0 0.0
      %441 = vmatpush1.msra.mxu0 0.0
      %442 = vmatprep.subr.mxu0 0.0
      %443 = vmatpush1.msra.mxu0 0.0
      %444 = vmatprep.subr.mxu0 0.0
      %445 = vmatpush1.msra.mxu0 0.0
      %446 = vmatprep.subr.mxu0 0.0
      %447 = vmatpush1.msra.mxu0 0.0
      %448 = vmatprep.subr.mxu0 0.0
      %449 = vmatpush1.msra.mxu0 0.0
      %450 = vmatprep.subr.mxu0 0.0
      %451 = vmatpush1.msra.mxu0 0.0
      %452 = vmatprep.subr.mxu0 0.0
      %453 = vmatpush1.msra.mxu0 0.0
      %454 = vmatprep.subr.mxu0 0.0
      %455 = vmatpush1.msra.mxu0 0.0
      %456 = vmatprep.subr.mxu0 0.0
      %457 = vmatpush1.msra.mxu0 0.0
      %458 = vmatprep.subr.mxu0 0.0
      %459 = vmatpush1.msra.mxu0 0.0
      %460 = vmatprep.subr.mxu0 0.0
      %461 = vmatpush1.msra.mxu0 0.0
      %462 = vmatprep.subr.mxu0 0.0
      %463 = vmatpush1.msra.mxu0 0.0
      %464 = vmatprep.subr.mxu0 0.0
      %465 = vmatpush1.msra.mxu0 0.0
      %466 = vmatprep.subr.mxu0 0.0
      %467 = vmatpush1.msra.mxu0 0.0
      %468 = vmatprep.subr.mxu0 0.0
      %469 = vmatpush1.msra.mxu0 0.0
      %470 = vmatprep.subr.mxu0 0.0
      %471 = vmatpush1.msra.mxu0 0.0
      %472 = vmatprep.subr.mxu0 0.0
      %473 = vmatpush1.msra.mxu0 0.0
      %474 = vmatprep.subr.mxu0 0.0
      %475 = vmatpush1.msra.mxu0 0.0
      %476 = vmatprep.subr.mxu0 0.0
      %477 = vmatpush1.msra.mxu0 0.0
      %478 = vmatprep.subr.mxu0 0.0
      %479 = vmatpush1.msra.mxu0 0.0
      %480 = vmatprep.subr.mxu0 0.0
      %481 = vmatpush1.msra.mxu0 0.0
      %482 = vmatprep.subr.mxu0 0.0
      %483 = vmatpush1.msra.mxu0 0.0
      %484 = vmatprep.subr.mxu0 0.0
      %485 = vmatpush1.msra.mxu0 0.0
      %486 = vmatprep.subr.mxu0 0.0
      %487 = vmatpush1.msra.mxu0 0.0
      %488 = vmatprep.subr.mxu0 0.0
      %489 = vmatpush1.msra.mxu0 0.0
      %490 = vmatprep.subr.mxu0 0.0
      %491 = vmatpush1.msra.mxu0 0.0
      %492 = vmatprep.subr.mxu0 0.0
      %493 = vmatpush1.msra.mxu0 0.0
      %494 = vmatprep.mubr.f32.mxu0 0.0
      %495 = vmatmul.mubr.f32.gmra.mrb[0].mxu0 %v428
      %v496 = vpop.f32.mrb[0].mxu0
      %v497 = vadd.f32 0.0, %v496
      %v498 = vpop.f32.mrb[0].mxu0
      %499 = vdwg.mxu0
      %v500 = vmul.f32 %v416, %v416
      %v501 = vmul.f32 %v497, %v497
      %v503 = vrot.slane %v501, 4
      %v505 = vadd.f32 %v501, %v503
      %vm506 = vcmask 64512
      %v508 = vsel %vm506, %v500, 0
      %510 = vmatprep.subr.mxu0 0.0
      %511 = vmatpush1.msra.mxu0 %v335
      %512 = vmatprep.subr.mxu0 0.0
      %513 = vmatpush1.msra.mxu0 0.0
      %514 = vmatprep.subr.mxu0 0.0
      %515 = vmatpush1.msra.mxu0 0.0
      %516 = vmatprep.subr.mxu0 0.0
      %517 = vmatpush1.msra.mxu0 0.0
      %518 = vmatprep.subr.mxu0 0.0
      %519 = vmatpush1.msra.mxu0 0.0
      %520 = vmatprep.subr.mxu0 0.0
      %521 = vmatpush1.msra.mxu0 0.0
      %522 = vmatprep.subr.mxu0 0.0
      %523 = vmatpush1.msra.mxu0 0.0
      %524 = vmatprep.subr.mxu0 0.0
      %525 = vmatpush1.msra.mxu0 0.0
      %526 = vmatprep.subr.mxu0 0.0
      %527 = vmatpush1.msra.mxu0 0.0
      %528 = vmatprep.subr.mxu0 0.0
      %529 = vmatpush1.msra.mxu0 0.0
      %530 = vmatprep.subr.mxu0 0.0
      %531 = vmatpush1.msra.mxu0 0.0
      %532 = vmatprep.subr.mxu0 0.0
      %533 = vmatpush1.msra.mxu0 0.0
      %534 = vmatprep.subr.mxu0 0.0
      %535 = vmatpush1.msra.mxu0 0.0
      %536 = vmatprep.subr.mxu0 0.0
      %537 = vmatpush1.msra.mxu0 0.0
      %538 = vmatprep.subr.mxu0 0.0
      %539 = vmatpush1.msra.mxu0 0.0
      %540 = vmatprep.subr.mxu0 0.0
      %541 = vmatpush1.msra.mxu0 0.0
      %542 = vmatprep.subr.mxu0 0.0
      %543 = vmatpush1.msra.mxu0 0.0
      %544 = vmatprep.subr.mxu0 0.0
      %545 = vmatpush1.msra.mxu0 0.0
      %546 = vmatprep.subr.mxu0 0.0
      %547 = vmatpush1.msra.mxu0 0.0
      %548 = vmatprep.subr.mxu0 0.0
      %549 = vmatpush1.msra.mxu0 0.0
      %550 = vmatprep.subr.mxu0 0.0
      %551 = vmatpush1.msra.mxu0 0.0
      %552 = vmatprep.subr.mxu0 0.0
      %553 = vmatpush1.msra.mxu0 0.0
      %554 = vmatprep.subr.mxu0 0.0
      %555 = vmatpush1.msra.mxu0 0.0
      %556 = vmatprep.subr.mxu0 0.0
      %557 = vmatpush1.msra.mxu0 0.0
      %558 = vmatprep.subr.mxu0 0.0
      %559 = vmatpush1.msra.mxu0 0.0
      %560 = vmatprep.subr.mxu0 0.0
      %561 = vmatpush1.msra.mxu0 0.0
      %562 = vmatprep.subr.mxu0 0.0
      %563 = vmatpush1.msra.mxu0 0.0
      %564 = vmatprep.subr.mxu0 0.0
      %565 = vmatpush1.msra.mxu0 0.0
      %566 = vmatprep.subr.mxu0 0.0
      %567 = vmatpush1.msra.mxu0 0.0
      %568 = vmatprep.subr.mxu0 0.0
      %569 = vmatpush1.msra.mxu0 0.0
      %570 = vmatprep.subr.mxu0 0.0
      %571 = vmatpush1.msra.mxu0 0.0
      %572 = vmatprep.subr.mxu0 0.0
      %573 = vmatpush1.msra.mxu0 0.0
      %574 = vmatprep.mubr.f32.mxu0 0.0
      %575 = vmatmul.mubr.f32.gmra.mrb[0].mxu0 %v508
      %v576 = vpop.f32.mrb[0].mxu0
      %v577 = vadd.f32 %v505, %v576
      %v578 = vpop.f32.mrb[0].mxu0
      %579 = vdwg.mxu0
      %s580 = smul.u32 %s337, 4
      %s581 = scalar_lea.vmem [#allocation14], %s580
      %vm582 = vcmask 27648
      %583 = vst.msk [vmem:[%s581] sm:$0xf] %vm582, %v577
    $region54: #{tpu_custom_call.1} parent=1 // loop_footer
      %s341 = sadd.s32 1, %s337
    $region55: #{tpu_custom_call.1} parent=1 // loop_footer_branch
      %336 = sbr.rel target = $region51
    $region56: #{tpu_custom_call.1} parent=1 // loop_exit
      _
    // Predicated region
    $region57: #{tpu_custom_call.1} parent=1 // pred_check
      _
    $region58: #{tpu_custom_call.1} parent=1 // pred_check_branch
      %585 = sbr.rel (0) target = $region60
    $region59: #{tpu_custom_call.1} parent=1 // pred_region
      %s587 = ssub.s32 256, 256
      %588 = vsyncadd [#allocation5], %s587
      %s589 = sshll.u32 [#allocation14], 4
      %s590 = int_to_ptr.vmem [resolvable:$true] %s589
      %595 = dma.vmem_to_hbm [thread:$0]  %s590, 256, %s6, [#allocation5], 64, 64, 4
    $region60: #{tpu_custom_call.1} parent=1 // pred_fallthru
      _
    // Predicated region
    $region61: #{tpu_custom_call.1} parent=1 // pred_check
      _
    $region62: #{tpu_custom_call.1} parent=1 // pred_check_branch
      %597 = sbr.rel (0) target = $region64
    $region63: #{tpu_custom_call.1} parent=1 // pred_region
      %598 = dma.done [#allocation5], 256
    $region64: #{tpu_custom_call.1} parent=1 // pred_fallthru
      _
    %599 = vsyncpa [#allocation4], 1
    %600 = vsyncpa [#allocation7], 1
    %601 = vsyncpa [#allocation10], 1
    %602 = vsyncpa [#allocation13], 1
    %603 = vsyncpa [#allocation5], 1

</llo_original>
